<compile_context>
chip_gen: v7x
topology: tpu7x:2x2x1
jax: 0.10.0
libtpu: 0.0.40
codegen_flags: <defaults>
</compile_context>

<pallas_src>
import functools

import jax
import jax.numpy as jnp
import numpy as np
from jax.experimental import pallas as pl
from jax.experimental.pallas import tpu as pltpu

# Cap on the lane tile: (rows, 16384) f32/bf16 intermediates + double-buffered x/out
# tiles stay well inside the scoped-VMEM budget on every generation (incl. v7x 64 MiB).
_MAX_TB = 16384


def mlp_kernel(x_ref, wpos_ref, wneg_ref, b2_ref, o_ref, *, compute_dtype):
    """sigmoid( sum_i relu(w1_i*x + b1_i) * w2_i + b2 ); batch on lanes, hidden on sublanes.

    x_ref   : (1, TB)  f32  batch tile along the lane axis
    wpos_ref: (P, 2)   f32  [w1*w2, b1*w2] rows with w2 >= 0, zero-padded to mult. of 8
    wneg_ref: (N, 2)   f32  [w1*w2, b1*w2] rows with w2 <  0, zero-padded to mult. of 8
    b2_ref  : (1, 1)   f32  output bias, SMEM scalar
    o_ref   : (1, TB)  f32  lane-dense output tile (unmasked vector stores)
    """
    x = x_ref[...].astype(compute_dtype)                      # (1, TB)
    wp = wpos_ref[...].astype(compute_dtype)                  # (P, 2)
    wn = wneg_ref[...].astype(compute_dtype)                  # (N, 2)
    # relu(a)*w2 == max(a*w2, 0) for w2 >= 0 and == min(a*w2, 0) for w2 < 0, so with w2
    # pre-folded into the first-layer weight/bias the inner loop is mul + add + max/min.
    hp = jnp.maximum(wp[:, 0:1] * x + wp[:, 1:2], 0.0)        # (P, TB)
    hn = jnp.minimum(wn[:, 0:1] * x + wn[:, 1:2], 0.0)        # (N, TB)
    # Padded rows have w == b == 0 -> max(0,0) == min(0,0) == 0, contributing exactly 0.
    # Accumulate the hidden->output reduction in f32 regardless of compute dtype.
    y = (jnp.sum(hp.astype(jnp.float32), axis=0, keepdims=True)
         + jnp.sum(hn.astype(jnp.float32), axis=0, keepdims=True)
         + b2_ref[0, 0])                                       # (1, TB) f32
    # Sigmoid on the tiny (1, TB) epilogue; exp + divide land on the EUP anyway.
    o_ref[...] = jax.nn.sigmoid(y)


def pack_params(w1, b1, w2, b2):
    """PyTorch-layout params -> sign-split, w2-folded column layout used by the kernel.

    w1: (H, 1), b1: (H,), w2: (1, H), b2: (1,)  ->  wpos (P, 2), wneg (N, 2), b2 (1, 1).
    """
    w1 = np.asarray(w1, np.float32).reshape(-1)
    b1 = np.asarray(b1, np.float32).reshape(-1)
    w2 = np.asarray(w2, np.float32).reshape(-1)
    wf, bf = w1 * w2, b1 * w2                       # fold w2 (with sign) into layer 1
    pos = np.nonzero(w2 >= 0)[0]
    neg = np.nonzero(w2 < 0)[0]

    def group(idx):
        rows = max(8, -(-len(idx) // 8) * 8)        # multiple of 8 sublanes, >= 8
        g = np.zeros((rows, 2), np.float32)         # padded rows contribute exactly 0
        g[: len(idx), 0] = wf[idx]
        g[: len(idx), 1] = bf[idx]
        return jnp.asarray(g)

    b2s = jnp.asarray(np.asarray(b2, np.float32).reshape(1, 1))
    return group(pos), group(neg), b2s


def _bf16_hidden_ok():
    """bf16 hidden path only on v6e / v7x; v5 and unknown chips stay pure f32."""
    try:
        kind = jax.devices()[0].device_kind.lower()
    except Exception:
        return False
    return ("v6" in kind) or ("v7" in kind)


@functools.partial(jax.jit, static_argnames=("block_b", "compute_dtype"))
def _mlp_forward_impl(x, wpos, wneg, b2s, *, block_b, compute_dtype):
    B = x.shape[0]
    p_rows = wpos.shape[0]
    n_rows = wneg.shape[0]

    # Lane-dense batch tiling: tb is a multiple of 128, large enough to amortize the
    # ~0.35us per-grid-step overhead, and capped so per-step VMEM stays small on v7x.
    b128 = pl.cdiv(B, 128) * 128
    tb = min(block_b, b128, _MAX_TB)
    tb = max(128, (tb // 128) * 128)                # guard non-multiple-of-128 block_b
    if b128 >= 2 * 128 and pl.cdiv(b128, tb) < 2:
        # Keep >= 2 "parallel" tiles so both v7x TensorCores get work.
        tb = pl.cdiv(b128, 2 * 128) * 128
    b_pad = pl.cdiv(b128, tb) * tb
    grid = (b_pad // tb,)

    # Layout plumbing: batch -> lane axis. The reshape is free for a contiguous (B, 1)
    # array; pad only the tail when needed (no full-array zeros().at[].set() copy).
    x_row = x.astype(jnp.float32).reshape(1, B)
    if b_pad != B:
        x_row = jnp.pad(x_row, ((0, 0), (0, b_pad - B)))

    out_row = pl.pallas_call(
        functools.partial(mlp_kernel, compute_dtype=compute_dtype),
        out_shape=jax.ShapeDtypeStruct((1, b_pad), jnp.float32),
        grid=grid,
        in_specs=[
            pl.BlockSpec((1, tb), lambda i: (0, i)),            # x, batch on lanes
            pl.BlockSpec((p_rows, 2), lambda i: (0, 0)),         # [w, b] rows, w2 >= 0
            pl.BlockSpec((n_rows, 2), lambda i: (0, 0)),         # [w, b] rows, w2 <  0
            pl.BlockSpec(memory_space=pltpu.MemorySpace.SMEM),   # b2 scalar
        ],
        out_specs=pl.BlockSpec((1, tb), lambda i: (0, i)),       # lane-dense stores
        compiler_params=pltpu.CompilerParams(
            dimension_semantics=("parallel",),   # batch tiles shard across TCs (v7x)
            vmem_limit_bytes=32 * 1024 * 1024,
        ),
    )(x_row, wpos, wneg, b2s)

    out_row = out_row if b_pad == B else out_row[:, :B]
    return out_row.reshape(B, 1)


def mlp_forward(x, wpos, wneg, b2s, block_b=8192, compute_dtype=None):
    """x: (B, 1) f32 -> (B, 1) f32; same semantics as MLP(hidden_size, num_layers=1)."""
    if compute_dtype is None:
        compute_dtype = jnp.bfloat16 if _bf16_hidden_ok() else jnp.float32
    return _mlp_forward_impl(x, wpos, wneg, b2s, block_b=block_b,
                             compute_dtype=compute_dtype)


def init_params(key, hidden_size=100):
    """nn.Linear-style init, PyTorch layouts: w1 (H,1), b1 (H,), w2 (1,H), b2 (1,)."""
    k1, k2, k3, k4 = jax.random.split(key, 4)
    bound1 = 1.0  # 1 / sqrt(in_features=1)
    w1 = jax.random.uniform(k1, (hidden_size, 1), jnp.float32, -bound1, bound1)
    b1 = jax.random.uniform(k2, (hidden_size,), jnp.float32, -bound1, bound1)
    bound2 = 1.0 / float(hidden_size) ** 0.5
    w2 = jax.random.uniform(k3, (1, hidden_size), jnp.float32, -bound2, bound2)
    b2 = jax.random.uniform(k4, (1,), jnp.float32, -bound2, bound2)
    return w1, b1, w2, b2


if __name__ == "__main__":
    hidden_size = 100  # module default
    batch = 8

    key = jax.random.PRNGKey(0)
    kx, kp = jax.random.split(key)
    x = jax.random.normal(kx, (batch, 1), jnp.float32)
    w1, b1, w2, b2 = init_params(kp, hidden_size)

    # TODO(synk): rest_hidden_layers (num_layers > 1, stack of H x H Linear+ReLU) is not
    # implemented; the module default num_layers=1 has zero such layers, so the forward
    # semantics here are complete for the default configuration.

    wpos, wneg, b2s = pack_params(w1, b1, w2, b2)

    # Pure-JAX reference in PyTorch layout.
    h_ref = jnp.maximum(x @ w1.T + b1[None, :], 0.0)
    y_ref = jax.nn.sigmoid(h_ref @ w2.T + b2[None, :])

    # Forced-f32 path: exact check, valid on every TPU generation.
    out_f32 = jax.block_until_ready(
        mlp_forward(x, wpos, wneg, b2s, compute_dtype=jnp.float32))
    assert out_f32.shape == (batch, 1)
    assert jnp.allclose(out_f32, y_ref, atol=1e-4, rtol=1e-4)

    # Auto path: bf16 hidden intermediates on v6e/v7x, f32 elsewhere.
    auto_bf16 = _bf16_hidden_ok()
    out = jax.block_until_ready(mlp_forward(x, wpos, wneg, b2s))
    tol = 5e-2 if auto_bf16 else 1e-4
    assert out.shape == (batch, 1)
    assert jnp.allclose(out, y_ref, atol=tol, rtol=tol)

    print("KERNEL_OK")
</pallas_src>

<mosaic_0001>
module attributes {stable_mosaic.version = 11 : i64} {
  func.func @mlp_kernel(%arg0: i32, %arg1: memref<1x128xf32, #tpu.memory_space<vmem>>, %arg2: memref<48x2xf32, #tpu.memory_space<vmem>>, %arg3: memref<64x2xf32, #tpu.memory_space<vmem>>, %arg4: memref<1x1xf32, #tpu.memory_space<smem>>, %arg5: memref<1x128xf32, #tpu.memory_space<vmem>>) attributes {dimension_semantics = [#tpu.dimension_semantics<parallel>], iteration_bounds = array<i64: 1>, scalar_prefetch = 0 : i64, scratch_operands = 0 : i64, tpu.core_type = #tpu.core_type<tc>, window_params = [{transform_indices = @transform_0, window_bounds = array<i64: 1, 128>}, {pipeline_mode = #tpu.pipeline_mode<synchronous>, transform_indices = @transform_1, window_bounds = array<i64: 48, 2>}, {pipeline_mode = #tpu.pipeline_mode<synchronous>, transform_indices = @transform_2, window_bounds = array<i64: 64, 2>}, {transform_indices = @transform_3, window_bounds = array<i64: 1, 1>}, {transform_indices = @transform_4, window_bounds = array<i64: 1, 128>}]} {
    %c0 = arith.constant 0 : index
    %c0_0 = arith.constant 0 : index
    %0 = vector.load %arg1[%c0, %c0_0] : memref<1x128xf32, #tpu.memory_space<vmem>>, vector<1x128xf32>
    %c0_1 = arith.constant 0 : index
    %c0_2 = arith.constant 0 : index
    %1 = vector.load %arg2[%c0_1, %c0_2] : memref<48x2xf32, #tpu.memory_space<vmem>>, vector<48x2xf32>
    %c0_3 = arith.constant 0 : index
    %c0_4 = arith.constant 0 : index
    %2 = vector.load %arg3[%c0_3, %c0_4] : memref<64x2xf32, #tpu.memory_space<vmem>>, vector<64x2xf32>
    %3 = vector.extract_strided_slice %1 {offsets = [0, 0], sizes = [48, 1], strides = [1, 1]} : vector<48x2xf32> to vector<48x1xf32>
    %4 = vector.broadcast %3 : vector<48x1xf32> to vector<48x128xf32>
    %5 = vector.broadcast %0 : vector<1x128xf32> to vector<48x128xf32>
    %6 = arith.mulf %4, %5 : vector<48x128xf32>
    %7 = vector.extract_strided_slice %1 {offsets = [0, 1], sizes = [48, 1], strides = [1, 1]} : vector<48x2xf32> to vector<48x1xf32>
    %8 = vector.broadcast %7 : vector<48x1xf32> to vector<48x128xf32>
    %9 = arith.addf %6, %8 : vector<48x128xf32>
    %cst = arith.constant 0.000000e+00 : f32
    %10 = vector.broadcast %cst : f32 to vector<48x128xf32>
    %11 = arith.maximumf %9, %10 : vector<48x128xf32>
    %12 = vector.extract_strided_slice %2 {offsets = [0, 0], sizes = [64, 1], strides = [1, 1]} : vector<64x2xf32> to vector<64x1xf32>
    %13 = vector.broadcast %12 : vector<64x1xf32> to vector<64x128xf32>
    %14 = vector.broadcast %0 : vector<1x128xf32> to vector<64x128xf32>
    %15 = arith.mulf %13, %14 : vector<64x128xf32>
    %16 = vector.extract_strided_slice %2 {offsets = [0, 1], sizes = [64, 1], strides = [1, 1]} : vector<64x2xf32> to vector<64x1xf32>
    %17 = vector.broadcast %16 : vector<64x1xf32> to vector<64x128xf32>
    %18 = arith.addf %15, %17 : vector<64x128xf32>
    %cst_5 = arith.constant 0.000000e+00 : f32
    %19 = vector.broadcast %cst_5 : f32 to vector<64x128xf32>
    %20 = arith.minimumf %18, %19 : vector<64x128xf32>
    %cst_6 = arith.constant dense<0.000000e+00> : vector<128xf32>
    %21 = vector.multi_reduction <add>, %11, %cst_6 [0] : vector<48x128xf32> to vector<128xf32>
    %22 = vector.shape_cast %21 : vector<128xf32> to vector<1x128xf32>
    %cst_7 = arith.constant dense<0.000000e+00> : vector<128xf32>
    %23 = vector.multi_reduction <add>, %20, %cst_7 [0] : vector<64x128xf32> to vector<128xf32>
    %24 = vector.shape_cast %23 : vector<128xf32> to vector<1x128xf32>
    %25 = arith.addf %22, %24 : vector<1x128xf32>
    %c0_8 = arith.constant 0 : index
    %c0_9 = arith.constant 0 : index
    %26 = memref.load %arg4[%c0_8, %c0_9] : memref<1x1xf32, #tpu.memory_space<smem>>
    %27 = vector.broadcast %26 : f32 to vector<1x128xf32>
    %28 = arith.addf %25, %27 : vector<1x128xf32>
    %29 = arith.negf %28 : vector<1x128xf32>
    %30 = math.exp %29 : vector<1x128xf32>
    %cst_10 = arith.constant 1.000000e+00 : f32
    %31 = vector.broadcast %cst_10 : f32 to vector<1x128xf32>
    %32 = arith.addf %31, %30 : vector<1x128xf32>
    %33 = arith.divf %31, %32 : vector<1x128xf32>
    %c0_11 = arith.constant 0 : index
    %c0_12 = arith.constant 0 : index
    %34 = vector.load %arg5[%c0_11, %c0_12] : memref<1x128xf32, #tpu.memory_space<vmem>>, vector<1x128xf32>
    tpu.vector_store %arg5[%c0_11, %c0_12], %33 {strides = array<i32>} : memref<1x128xf32, #tpu.memory_space<vmem>>, vector<1x128xf32>,
    return
  }
  func.func @transform_0(%arg0: i32) -> (i32, i32) {
    %c0_i32 = arith.constant 0 : i32
    %c0_i32_0 = arith.constant 0 : i32
    return %c0_i32, %arg0 : i32, i32
  }
  func.func @transform_1(%arg0: i32) -> (i32, i32) {
    %c0_i32 = arith.constant 0 : i32
    %c0_i32_0 = arith.constant 0 : i32
    %c0_i32_1 = arith.constant 0 : i32
    return %c0_i32, %c0_i32_0 : i32, i32
  }
  func.func @transform_2(%arg0: i32) -> (i32, i32) {
    %c0_i32 = arith.constant 0 : i32
    %c0_i32_0 = arith.constant 0 : i32
    %c0_i32_1 = arith.constant 0 : i32
    return %c0_i32, %c0_i32_0 : i32, i32
  }
  func.func @transform_3(%arg0: i32) -> (i32, i32) {
    %c0_i32 = arith.constant 0 : i32
    %c0_i32_0 = arith.constant 0 : i32
    %c0_i32_1 = arith.constant 0 : i32
    return %c0_i32, %c0_i32_0 : i32, i32
  }
  func.func @transform_4(%arg0: i32) -> (i32, i32) {
    %c0_i32 = arith.constant 0 : i32
    %c0_i32_0 = arith.constant 0 : i32
    return %c0_i32, %arg0 : i32, i32
  }
}

</mosaic_0001>

<llo_original>
// kernel: _mlp_forward_impl.1
$region0: #{_mlp_forward_impl.1}
  #allocation0 [shape = 'u32[]', space=smem, size = 0x4, offset = 0x4, fixed_abs, tag = 'smem constant byte address 0x4 - core index']
  #allocation1 [shape = 'u32[144,128]{1,0:T(1,128)}', space=vmem, size = 0x12000, scoped, tag = 'internal scratch']
  #allocation2 [shape = 'f32[1,1]{1,0:T(1,128)S(6)}', space=smem, size = 0x200, scoped, tag = 'scoped memory for _mlp_forward_impl.1']
  %s0 = inlined_call_operand.vmem [shape: f32[1,128], index: 0, kind: input, shape index: {}]
  %s1 = inlined_call_operand.vmem [shape: f32[48,2], index: 1, kind: input, shape index: {}]
  %s2 = inlined_call_operand.vmem [shape: f32[64,2], index: 2, kind: input, shape index: {}]
  %s3 = inlined_call_operand.<no memory space> [shape: f32[1,1], index: 3, kind: input, shape index: {}]
  %s4 = inlined_call_operand.vmem [shape: f32[1,128], index: 4, kind: output, shape index: {}]
  %s5 = sld [smem:[#allocation0]]
  $region26: #{_mlp_forward_impl.1} parent=0
    _
  %s7 = ssub.s32 1, %s5
  %s8 = scalar_select 0, %s7, %s5
  %9 = sst [smem:[#allocation2]] %s3
  // Predicated region
  $region2: #{_mlp_forward_impl.1} parent=0 // pred_check
    _
  $region3: #{_mlp_forward_impl.1} parent=0 // pred_check_branch
    %11 = sbr.rel (0) target = $region5
  $region4: #{_mlp_forward_impl.1} parent=0 // pred_region
    _
  $region5: #{_mlp_forward_impl.1} parent=0 // pred_fallthru
    _
  // Predicated region
  $region6: #{_mlp_forward_impl.1} parent=0 // pred_check
    _
  $region7: #{_mlp_forward_impl.1} parent=0 // pred_check_branch
    %13 = sbr.rel (0) target = $region9
  $region8: #{_mlp_forward_impl.1} parent=0 // pred_region
    _
  $region9: #{_mlp_forward_impl.1} parent=0 // pred_fallthru
    _
  // Predicated region
  $region10: #{_mlp_forward_impl.1} parent=0 // pred_check
    _
  $region11: #{_mlp_forward_impl.1} parent=0 // pred_check_branch
    %15 = sbr.rel (0) target = $region13
  $region12: #{_mlp_forward_impl.1} parent=0 // pred_region
    _
  $region13: #{_mlp_forward_impl.1} parent=0 // pred_fallthru
    _
  // Predicated region
  $region14: #{_mlp_forward_impl.1} parent=0 // pred_check
    _
  $region15: #{_mlp_forward_impl.1} parent=0 // pred_check_branch
    %17 = sbr.rel (0) target = $region17
  $region16: #{_mlp_forward_impl.1} parent=0 // pred_region
    _
  $region17: #{_mlp_forward_impl.1} parent=0 // pred_fallthru
    _
  %v18 = vld [vmem:[%s0] sm:$0x1]
  %v19 = vld [vmem:[%s1] sm:$0xff]
  %v20 = vld [vmem:[%s1 + $0x8] sm:$0xff]
  %v21 = vld [vmem:[%s1 + $0x10] sm:$0xff]
  %v22 = vld [vmem:[%s1 + $0x18] sm:$0xff]
  %v23 = vld [vmem:[%s1 + $0x20] sm:$0xff]
  %v24 = vld [vmem:[%s1 + $0x28] sm:$0xff]
  %v25 = vld [vmem:[%s2] sm:$0xff]
  %v26 = vld [vmem:[%s2 + $0x8] sm:$0xff]
  %v27 = vld [vmem:[%s2 + $0x10] sm:$0xff]
  %v28 = vld [vmem:[%s2 + $0x18] sm:$0xff]
  %v29 = vld [vmem:[%s2 + $0x20] sm:$0xff]
  %v30 = vld [vmem:[%s2 + $0x28] sm:$0xff]
  %v31 = vld [vmem:[%s2 + $0x30] sm:$0xff]
  %v32 = vld [vmem:[%s2 + $0x38] sm:$0xff]
  %34 = vset.pattern.permute.xlu0 0
  %35 = vperm.xlu0 %34, %v19
  %v36 = vpop.permute.xlu0 %35
  %39 = vset.pattern.permute.xlu0 0
  %40 = vperm.xlu0 %39, %v20
  %v41 = vpop.permute.xlu0 %40
  %44 = vset.pattern.permute.xlu0 0
  %45 = vperm.xlu0 %44, %v21
  %v46 = vpop.permute.xlu0 %45
  %49 = vset.pattern.permute.xlu0 0
  %50 = vperm.xlu0 %49, %v22
  %v51 = vpop.permute.xlu0 %50
  %54 = vset.pattern.permute.xlu0 0
  %55 = vperm.xlu0 %54, %v23
  %v56 = vpop.permute.xlu0 %55
  %59 = vset.pattern.permute.xlu0 0
  %60 = vperm.xlu0 %59, %v24
  %v61 = vpop.permute.xlu0 %60
  %v64 = vlaneseq
  %v65 = vshrl.u32 %v64, 7
  %v66 = vsub.s32 0, %v65
  %v67 = vrot.slane %v18, %v66
  %v69 = vmul.f32 %v36, %v67
  %v70 = vmul.f32 %v41, %v67
  %v71 = vmul.f32 %v46, %v67
  %v72 = vmul.f32 %v51, %v67
  %v73 = vmul.f32 %v56, %v67
  %v74 = vmul.f32 %v61, %v67
  %75 = vset.pattern.permute.xlu0 1
  %76 = vperm.xlu0 %75, %v19
  %v77 = vpop.permute.xlu0 %76
  %79 = vset.pattern.permute.xlu0 1
  %80 = vperm.xlu0 %79, %v20
  %v81 = vpop.permute.xlu0 %80
  %83 = vset.pattern.permute.xlu0 1
  %84 = vperm.xlu0 %83, %v21
  %v85 = vpop.permute.xlu0 %84
  %87 = vset.pattern.permute.xlu0 1
  %88 = vperm.xlu0 %87, %v22
  %v89 = vpop.permute.xlu0 %88
  %91 = vset.pattern.permute.xlu0 1
  %92 = vperm.xlu0 %91, %v23
  %v93 = vpop.permute.xlu0 %92
  %95 = vset.pattern.permute.xlu0 1
  %96 = vperm.xlu0 %95, %v24
  %v97 = vpop.permute.xlu0 %96
  %v99 = vadd.f32 %v69, %v77
  %v100 = vadd.f32 %v70, %v81
  %v101 = vadd.f32 %v71, %v85
  %v102 = vadd.f32 %v72, %v89
  %v103 = vadd.f32 %v73, %v93
  %v104 = vadd.f32 %v74, %v97
  %v105 = vmax.f32 %v99, 0.0
  %v106 = vmax.f32 %v100, 0.0
  %v107 = vmax.f32 %v101, 0.0
  %v108 = vmax.f32 %v102, 0.0
  %v109 = vmax.f32 %v103, 0.0
  %v110 = vmax.f32 %v104, 0.0
  %112 = vset.pattern.permute.xlu0 0
  %113 = vperm.xlu0 %112, %v25
  %v114 = vpop.permute.xlu0 %113
  %117 = vset.pattern.permute.xlu0 0
  %118 = vperm.xlu0 %117, %v26
  %v119 = vpop.permute.xlu0 %118
  %122 = vset.pattern.permute.xlu0 0
  %123 = vperm.xlu0 %122, %v27
  %v124 = vpop.permute.xlu0 %123
  %127 = vset.pattern.permute.xlu0 0
  %128 = vperm.xlu0 %127, %v28
  %v129 = vpop.permute.xlu0 %128
  %132 = vset.pattern.permute.xlu0 0
  %133 = vperm.xlu0 %132, %v29
  %v134 = vpop.permute.xlu0 %133
  %137 = vset.pattern.permute.xlu0 0
  %138 = vperm.xlu0 %137, %v30
  %v139 = vpop.permute.xlu0 %138
  %142 = vset.pattern.permute.xlu0 0
  %143 = vperm.xlu0 %142, %v31
  %v144 = vpop.permute.xlu0 %143
  %147 = vset.pattern.permute.xlu0 0
  %148 = vperm.xlu0 %147, %v32
  %v149 = vpop.permute.xlu0 %148
  %v151 = vmul.f32 %v114, %v67
  %v152 = vmul.f32 %v119, %v67
  %v153 = vmul.f32 %v124, %v67
  %v154 = vmul.f32 %v129, %v67
  %v155 = vmul.f32 %v134, %v67
  %v156 = vmul.f32 %v139, %v67
  %v157 = vmul.f32 %v144, %v67
  %v158 = vmul.f32 %v149, %v67
  %159 = vset.pattern.permute.xlu0 1
  %160 = vperm.xlu0 %159, %v25
  %v161 = vpop.permute.xlu0 %160
  %163 = vset.pattern.permute.xlu0 1
  %164 = vperm.xlu0 %163, %v26
  %v165 = vpop.permute.xlu0 %164
  %167 = vset.pattern.permute.xlu0 1
  %168 = vperm.xlu0 %167, %v27
  %v169 = vpop.permute.xlu0 %168
  %171 = vset.pattern.permute.xlu0 1
  %172 = vperm.xlu0 %171, %v28
  %v173 = vpop.permute.xlu0 %172
  %175 = vset.pattern.permute.xlu0 1
  %176 = vperm.xlu0 %175, %v29
  %v177 = vpop.permute.xlu0 %176
  %179 = vset.pattern.permute.xlu0 1
  %180 = vperm.xlu0 %179, %v30
  %v181 = vpop.permute.xlu0 %180
  %183 = vset.pattern.permute.xlu0 1
  %184 = vperm.xlu0 %183, %v31
  %v185 = vpop.permute.xlu0 %184
  %187 = vset.pattern.permute.xlu0 1
  %188 = vperm.xlu0 %187, %v32
  %v189 = vpop.permute.xlu0 %188
  %v191 = vadd.f32 %v151, %v161
  %v192 = vadd.f32 %v152, %v165
  %v193 = vadd.f32 %v153, %v169
  %v194 = vadd.f32 %v154, %v173
  %v195 = vadd.f32 %v155, %v177
  %v196 = vadd.f32 %v156, %v181
  %v197 = vadd.f32 %v157, %v185
  %v198 = vadd.f32 %v158, %v189
  %v199 = vmin.f32 %v191, 0.0
  %v200 = vmin.f32 %v192, 0.0
  %v201 = vmin.f32 %v193, 0.0
  %v202 = vmin.f32 %v194, 0.0
  %v203 = vmin.f32 %v195, 0.0
  %v204 = vmin.f32 %v196, 0.0
  %v205 = vmin.f32 %v197, 0.0
  %v206 = vmin.f32 %v198, 0.0
  %v207 = vadd.f32 %v105, %v106
  %v208 = vadd.f32 %v207, %v107
  %v209 = vadd.f32 %v208, %v108
  %v210 = vadd.f32 %v209, %v109
  %v211 = vadd.f32 %v210, %v110
  %v212 = vrot.slane %v211, 4
  %v213 = vadd.f32 %v211, %v212
  %v214 = vrot.slane %v213, 2
  %v215 = vadd.f32 %v213, %v214
  %v216 = vrot.slane %v215, 1
  %v217 = vadd.f32 %v215, %v216
  %v218 = vadd.f32 %v199, %v200
  %v219 = vadd.f32 %v218, %v201
  %v220 = vadd.f32 %v219, %v202
  %v221 = vadd.f32 %v220, %v203
  %v222 = vadd.f32 %v221, %v204
  %v223 = vadd.f32 %v222, %v205
  %v224 = vadd.f32 %v223, %v206
  %v225 = vrot.slane %v224, 4
  %v226 = vadd.f32 %v224, %v225
  %v227 = vrot.slane %v226, 2
  %v228 = vadd.f32 %v226, %v227
  %v229 = vrot.slane %v228, 1
  %v230 = vadd.f32 %v228, %v229
  %v231 = vadd.f32 %v217, %v230
  %s232 = sld [smem:[#allocation2]]
  %v233 = vstv %s232
  %v234 = vadd.f32 %v231, %v233
  %v235 = vxor.u32 %v234, 2147483648
  %v236 = vmul.f32 %v235, 1.442695
  %v237 = vpow.pop %v236
  %v238 = vadd.f32 %v237, 1.0
  %v239 = vrcp.pop %v238
  %v240 = vmul.f32 1.0, %v239
  %241 = vst [vmem:[%s4] sm:$0x1] %v240
  // Predicated region
  $region18: #{_mlp_forward_impl.1} parent=0 // pred_check
    _
  $region19: #{_mlp_forward_impl.1} parent=0 // pred_check_branch
    %243 = sbr.rel (0) target = $region21
  $region20: #{_mlp_forward_impl.1} parent=0 // pred_region
    _
  $region21: #{_mlp_forward_impl.1} parent=0 // pred_fallthru
    _
  // Predicated region
  $region22: #{_mlp_forward_impl.1} parent=0 // pred_check
    _
  $region23: #{_mlp_forward_impl.1} parent=0 // pred_check_branch
    %245 = sbr.rel (0) target = $region25
  $region24: #{_mlp_forward_impl.1} parent=0 // pred_region
    _
  $region25: #{_mlp_forward_impl.1} parent=0 // pred_fallthru
    _

</llo_original>
